<compile_context>
chip_gen: v5e
topology: v5e:2x2
jax: 0.10.0
libtpu: 0.0.40
codegen_flags: <defaults>
</compile_context>

<pallas_src>
import functools

import jax
import jax.numpy as jnp
import numpy as np
from jax.experimental import pallas as pl
from jax.experimental.pallas import tpu as pltpu


def _round_up(x: int, m: int) -> int:
    return ((x + m - 1) // m) * m


def _ode_mlp_kernel(x_ref, w1t_ref, b1_ref, w2t_ref, b2_ref, out_ref,
                    *, input_power: int, input_dim: int):
    # x_ref  : (D+1, TILE_M)  feature-major; rows = [y_0 .. y_{D-1}, t], lanes = batch rows
    # w1t_ref: (H, D+1)       first Linear weight, transposed (out x in)
    # b1_ref : (H, 1)
    # w2t_ref: (O, H)         second Linear weight, transposed (out x in)
    # b2_ref : (O, 1)
    # out_ref: (O, TILE_M)
    x = x_ref[...].astype(jnp.float32)

    # Element-wise power applied only to the y rows; the t row passes through.
    row = jax.lax.broadcasted_iota(jnp.int32, x.shape, 0)
    xp = jnp.where(row < input_dim, x ** input_power, x)

    # hidden^T = tanh(W1^T @ [y^p ; t] + b1)
    h = jnp.dot(w1t_ref[...], xp, preferred_element_type=jnp.float32)
    h = jnp.tanh(h + b1_ref[...])

    # out^T = W2^T @ hidden^T + b2
    out = jnp.dot(w2t_ref[...], h, preferred_element_type=jnp.float32) + b2_ref[...]
    out_ref[...] = out.astype(out_ref.dtype)


def neural_net_ode_func(t, y, params, *, input_power: int, tile_m: int = 1024):
    """Forward pass equivalent to NeuralNetOdeFunc.forward(t, y)."""
    w1, b1, w2, b2 = params            # w1: (D+1, H), b1: (H,), w2: (H, O), b2: (O,)
    hidden_dim = w1.shape[1]
    out_dim = w2.shape[1]
    dtype = y.dtype

    if y.ndim == 2:
        # PyTorch 2D path: y (1, D), scalar t appended as (1, 1)
        y_flat = y
        t_col = jnp.reshape(jnp.asarray(t, dtype), (1, 1))
        out_batch_shape = (y.shape[0], out_dim)
    elif y.ndim == 3:
        b, s, d_ = y.shape
        if jnp.ndim(t) == 0:
            # scalar t broadcast over (b, s, 1)
            t_tensor = jnp.full((b, s, 1), t, dtype=dtype)
        else:
            t_tensor = jnp.broadcast_to(jnp.asarray(t, dtype), (b, s, 1))
        y_flat = y.reshape(b * s, d_)
        t_col = t_tensor.reshape(b * s, 1)
        out_batch_shape = (b, s, out_dim)
    else:
        raise ValueError(f"Unsupported y.ndim = {y.ndim}")

    m, d = y_flat.shape

    # Feature-major, lane-dense input with t folded in as the last feature row.
    x_t = jnp.concatenate([y_flat, t_col], axis=1).T            # (D+1, M)

    # Pad M (lanes) to a multiple of the row tile (itself a multiple of 128).
    tile = min(tile_m, _round_up(m, 128))
    m_pad = _round_up(m, tile)
    if m_pad != m:
        x_t = jnp.pad(x_t, ((0, 0), (0, m_pad - m)))

    w1t = w1.T                                                  # (H, D+1)
    w2t = w2.T                                                  # (O, H)
    b1c = b1.reshape(hidden_dim, 1)
    b2c = b2.reshape(out_dim, 1)

    grid = (m_pad // tile,)
    out_t = pl.pallas_call(
        functools.partial(_ode_mlp_kernel, input_power=input_power, input_dim=d),
        out_shape=jax.ShapeDtypeStruct((out_dim, m_pad), dtype),
        grid=grid,
        in_specs=[
            pl.BlockSpec((d + 1, tile), lambda i: (0, i)),          # x^T, tiled over M
            pl.BlockSpec((hidden_dim, d + 1), lambda i: (0, 0)),    # W1^T (resident)
            pl.BlockSpec((hidden_dim, 1), lambda i: (0, 0)),        # b1
            pl.BlockSpec((out_dim, hidden_dim), lambda i: (0, 0)),  # W2^T (resident)
            pl.BlockSpec((out_dim, 1), lambda i: (0, 0)),           # b2
        ],
        out_specs=pl.BlockSpec((out_dim, tile), lambda i: (0, i)),  # out^T, lane-dense
        compiler_params=pltpu.CompilerParams(
            dimension_semantics=("parallel",)),
    )(x_t, w1t, b1c, w2t, b2c)

    out_flat = out_t[:, :m].T                                   # (M, O)
    return out_flat.reshape(out_batch_shape)


def _reference(t, y, params, *, input_power):
    # Pure-JAX reference mirroring the PyTorch module exactly.
    w1, b1, w2, b2 = params
    yp = y ** input_power
    t_tensor = jnp.broadcast_to(jnp.asarray(t, y.dtype), y.shape[:-1] + (1,))
    y_aug = jnp.concatenate([yp, t_tensor], axis=-1)
    h = jnp.tanh(y_aug @ w1 + b1)
    return h @ w2 + b2


def init_params(key, input_dim, output_dim, hidden_dim):
    # nn.init.normal_(weight, mean=0, std=0.1); bias = 0
    k1, k2 = jax.random.split(key)
    w1 = 0.1 * jax.random.normal(k1, (input_dim + 1, hidden_dim), dtype=jnp.float32)
    b1 = jnp.zeros((hidden_dim,), dtype=jnp.float32)
    w2 = 0.1 * jax.random.normal(k2, (hidden_dim, output_dim), dtype=jnp.float32)
    b2 = jnp.zeros((output_dim,), dtype=jnp.float32)
    return (w1, b1, w2, b2)


if __name__ == "__main__":
    input_dim = 4
    output_dim = 4
    hidden_dim = 32
    input_power = 2
    batch, seq = 2, 8

    key = jax.random.PRNGKey(0)
    k_params, k_y, k_t = jax.random.split(key, 3)

    params = init_params(k_params, input_dim, output_dim, hidden_dim)
    y = jax.random.normal(k_y, (batch, seq, input_dim), dtype=jnp.float32)
    t = jax.random.uniform(k_t, (batch, seq, 1), dtype=jnp.float32)

    # 3D path
    out = neural_net_ode_func(t, y, params, input_power=input_power)
    out = jax.block_until_ready(out)
    ref = _reference(t, y, params, input_power=input_power)
    assert out.shape == (batch, seq, output_dim)
    assert np.allclose(np.asarray(out), np.asarray(ref), rtol=1e-5, atol=1e-5)

    # 2D path (y (1, D), scalar t)
    y2 = jax.random.normal(k_y, (1, input_dim), dtype=jnp.float32)
    t2 = jnp.float32(0.25)
    out2 = jax.block_until_ready(
        neural_net_ode_func(t2, y2, params, input_power=input_power))
    ref2 = _reference(t2, y2, params, input_power=input_power)
    assert out2.shape == (1, output_dim)
    assert np.allclose(np.asarray(out2), np.asarray(ref2), rtol=1e-5, atol=1e-5)

    print("KERNEL_OK")
</pallas_src>

<mosaic_0001>
module attributes {stable_mosaic.version = 11 : i64} {
  func.func @_ode_mlp_kernel(%arg0: i32, %arg1: memref<5x128xf32, #tpu.memory_space<vmem>>, %arg2: memref<32x5xf32, #tpu.memory_space<vmem>>, %arg3: memref<32x1xf32, #tpu.memory_space<vmem>>, %arg4: memref<4x32xf32, #tpu.memory_space<vmem>>, %arg5: memref<4x1xf32, #tpu.memory_space<vmem>>, %arg6: memref<4x128xf32, #tpu.memory_space<vmem>>) attributes {dimension_semantics = [#tpu.dimension_semantics<parallel>], iteration_bounds = array<i64: 1>, scalar_prefetch = 0 : i64, scratch_operands = 0 : i64, tpu.core_type = #tpu.core_type<tc>, window_params = [{transform_indices = @transform_0, window_bounds = array<i64: 5, 128>}, {pipeline_mode = #tpu.pipeline_mode<synchronous>, transform_indices = @transform_1, window_bounds = array<i64: 32, 5>}, {pipeline_mode = #tpu.pipeline_mode<synchronous>, transform_indices = @transform_2, window_bounds = array<i64: 32, 1>}, {pipeline_mode = #tpu.pipeline_mode<synchronous>, transform_indices = @transform_3, window_bounds = array<i64: 4, 32>}, {pipeline_mode = #tpu.pipeline_mode<synchronous>, transform_indices = @transform_4, window_bounds = array<i64: 4, 1>}, {transform_indices = @transform_5, window_bounds = array<i64: 4, 128>}]} {
    %c0 = arith.constant 0 : index
    %c0_0 = arith.constant 0 : index
    %0 = vector.load %arg1[%c0, %c0_0] : memref<5x128xf32, #tpu.memory_space<vmem>>, vector<5x128xf32>
    %1 = tpu.iota {dimensions = array<i32: 0>} : vector<5x128xi32>
    %c4_i32 = arith.constant 4 : i32
    %2 = vector.broadcast %c4_i32 : i32 to vector<5x128xi32>
    %3 = arith.cmpi slt, %1, %2 : vector<5x128xi32>
    %4 = arith.mulf %0, %0 : vector<5x128xf32>
    %5 = arith.select %3, %4, %0 : vector<5x128xi1>, vector<5x128xf32>
    %c0_1 = arith.constant 0 : index
    %c0_2 = arith.constant 0 : index
    %6 = vector.load %arg2[%c0_1, %c0_2] : memref<32x5xf32, #tpu.memory_space<vmem>>, vector<32x5xf32>
    %cst = arith.constant dense<0.000000e+00> : vector<32x128xf32>
    %7 = tpu.matmul %6, %5, %cst {dimension_numbers = #tpu.dot_dimension_numbers<[1], [0], [0], [1], [0, 0, 1, 1], [], []>} : vector<32x5xf32>, vector<5x128xf32>, vector<32x128xf32> -> vector<32x128xf32>
    %c0_3 = arith.constant 0 : index
    %c0_4 = arith.constant 0 : index
    %8 = vector.load %arg3[%c0_3, %c0_4] : memref<32x1xf32, #tpu.memory_space<vmem>>, vector<32x1xf32>
    %9 = vector.broadcast %8 : vector<32x1xf32> to vector<32x128xf32>
    %10 = arith.addf %7, %9 : vector<32x128xf32>
    %11 = math.tanh %10 : vector<32x128xf32>
    %c0_5 = arith.constant 0 : index
    %c0_6 = arith.constant 0 : index
    %12 = vector.load %arg4[%c0_5, %c0_6] : memref<4x32xf32, #tpu.memory_space<vmem>>, vector<4x32xf32>
    %cst_7 = arith.constant dense<0.000000e+00> : vector<4x128xf32>
    %13 = tpu.matmul %12, %11, %cst_7 {dimension_numbers = #tpu.dot_dimension_numbers<[1], [0], [0], [1], [0, 0, 1, 1], [], []>} : vector<4x32xf32>, vector<32x128xf32>, vector<4x128xf32> -> vector<4x128xf32>
    %c0_8 = arith.constant 0 : index
    %c0_9 = arith.constant 0 : index
    %14 = vector.load %arg5[%c0_8, %c0_9] : memref<4x1xf32, #tpu.memory_space<vmem>>, vector<4x1xf32>
    %15 = vector.broadcast %14 : vector<4x1xf32> to vector<4x128xf32>
    %16 = arith.addf %13, %15 : vector<4x128xf32>
    %c0_10 = arith.constant 0 : index
    %c0_11 = arith.constant 0 : index
    %17 = vector.load %arg6[%c0_10, %c0_11] : memref<4x128xf32, #tpu.memory_space<vmem>>, vector<4x128xf32>
    tpu.vector_store %arg6[%c0_10, %c0_11], %16 {strides = array<i32>} : memref<4x128xf32, #tpu.memory_space<vmem>>, vector<4x128xf32>,
    return
  }
  func.func @transform_0(%arg0: i32) -> (i32, i32) {
    %c0_i32 = arith.constant 0 : i32
    %c0_i32_0 = arith.constant 0 : i32
    return %c0_i32, %arg0 : i32, i32
  }
  func.func @transform_1(%arg0: i32) -> (i32, i32) {
    %c0_i32 = arith.constant 0 : i32
    %c0_i32_0 = arith.constant 0 : i32
    %c0_i32_1 = arith.constant 0 : i32
    return %c0_i32, %c0_i32_0 : i32, i32
  }
  func.func @transform_2(%arg0: i32) -> (i32, i32) {
    %c0_i32 = arith.constant 0 : i32
    %c0_i32_0 = arith.constant 0 : i32
    %c0_i32_1 = arith.constant 0 : i32
    return %c0_i32, %c0_i32_0 : i32, i32
  }
  func.func @transform_3(%arg0: i32) -> (i32, i32) {
    %c0_i32 = arith.constant 0 : i32
    %c0_i32_0 = arith.constant 0 : i32
    %c0_i32_1 = arith.constant 0 : i32
    return %c0_i32, %c0_i32_0 : i32, i32
  }
  func.func @transform_4(%arg0: i32) -> (i32, i32) {
    %c0_i32 = arith.constant 0 : i32
    %c0_i32_0 = arith.constant 0 : i32
    %c0_i32_1 = arith.constant 0 : i32
    return %c0_i32, %c0_i32_0 : i32, i32
  }
  func.func @transform_5(%arg0: i32) -> (i32, i32) {
    %c0_i32 = arith.constant 0 : i32
    %c0_i32_0 = arith.constant 0 : i32
    return %c0_i32, %arg0 : i32, i32
  }
}

</mosaic_0001>

<llo_original>
// kernel: tpu_custom_call.1
$region0: #{tpu_custom_call.1}
  #allocation0 [shape = 'u32[]', space=smem, size = 0x4, offset = 0x4, fixed_abs, tag = 'smem constant byte address 0x4 - core index']
  #allocation1 [shape = 'u32[72,128]{1,0:T(1,128)}', space=vmem, size = 0x9000, scoped, tag = 'internal scratch']
  %s0 = inlined_call_operand.vmem [shape: f32[5,128], index: 0, kind: input, shape index: {}]
  %s1 = inlined_call_operand.vmem [shape: f32[32,5], index: 1, kind: input, shape index: {}]
  %s2 = inlined_call_operand.vmem [shape: f32[32,1], index: 2, kind: input, shape index: {}]
  %s3 = inlined_call_operand.vmem [shape: f32[4,32], index: 3, kind: input, shape index: {}]
  %s4 = inlined_call_operand.vmem [shape: f32[4,1], index: 4, kind: input, shape index: {}]
  %s5 = inlined_call_operand.hbm [shape: f32[4,128], index: 5, kind: output, shape index: {}]
  %s6 = sld [smem:[#allocation0]]
  $region30: #{tpu_custom_call.1} parent=0
    _
  %s8 = ssub.s32 1, %s6
  %s9 = scalar_select 0, %s8, %s6
  $region1: #{tpu_custom_call.1} parent=0
    #allocation2 [shape = 'u8[2048]{0}', space=vmem, size = 0x800, scoped, tag = 'output window, operand 0, single buffered']
    #allocation3 [shape = 's32[1]{0}', space=sflag, size = 0x4, scoped, tag = 'scoped memory for tpu_custom_call.1']
    %10 = vsyncpa [#allocation3], 0
    // Predicated region
    $region2: #{tpu_custom_call.1} parent=1 // pred_check
      _
    $region3: #{tpu_custom_call.1} parent=1 // pred_check_branch
      %12 = sbr.rel (0) target = $region5
    $region4: #{tpu_custom_call.1} parent=1 // pred_region
      _
    $region5: #{tpu_custom_call.1} parent=1 // pred_fallthru
      _
    // Predicated region
    $region6: #{tpu_custom_call.1} parent=1 // pred_check
      _
    $region7: #{tpu_custom_call.1} parent=1 // pred_check_branch
      %14 = sbr.rel (0) target = $region9
    $region8: #{tpu_custom_call.1} parent=1 // pred_region
      _
    $region9: #{tpu_custom_call.1} parent=1 // pred_fallthru
      _
    // Predicated region
    $region10: #{tpu_custom_call.1} parent=1 // pred_check
      _
    $region11: #{tpu_custom_call.1} parent=1 // pred_check_branch
      %16 = sbr.rel (0) target = $region13
    $region12: #{tpu_custom_call.1} parent=1 // pred_region
      _
    $region13: #{tpu_custom_call.1} parent=1 // pred_fallthru
      _
    // Predicated region
    $region14: #{tpu_custom_call.1} parent=1 // pred_check
      _
    $region15: #{tpu_custom_call.1} parent=1 // pred_check_branch
      %18 = sbr.rel (0) target = $region17
    $region16: #{tpu_custom_call.1} parent=1 // pred_region
      _
    $region17: #{tpu_custom_call.1} parent=1 // pred_fallthru
      _
    // Predicated region
    $region18: #{tpu_custom_call.1} parent=1 // pred_check
      _
    $region19: #{tpu_custom_call.1} parent=1 // pred_check_branch
      %20 = sbr.rel (0) target = $region21
    $region20: #{tpu_custom_call.1} parent=1 // pred_region
      _
    $region21: #{tpu_custom_call.1} parent=1 // pred_fallthru
      _
    %v21 = vld [vmem:[%s0] sm:$0x1f]
    %v22 = vlaneseq
    %v23 = vshrl.u32 %v22, 7
    %vm24 = vcmp.lt.s32.totalorder %v23, 4
    %v25 = vmul.f32 %v21, %v21
    %v26 = vsel %vm24, %v25, %v21
    %v27 = vld [vmem:[%s1] sm:$0xff]
    %v28 = vld [vmem:[%s1 + $0x8] sm:$0xff]
    %v29 = vld [vmem:[%s1 + $0x10] sm:$0xff]
    %v30 = vld [vmem:[%s1 + $0x18] sm:$0xff]
    %v31 = vld [vmem:[%s2] sm:$0xff]
    %v32 = vld [vmem:[%s2 + $0x8] sm:$0xff]
    %v33 = vld [vmem:[%s2 + $0x10] sm:$0xff]
    %v34 = vld [vmem:[%s2 + $0x18] sm:$0xff]
    %36 = vset.pattern.permute.xlu0 0
    %37 = vperm.xlu0 %36, %v31
    %v38 = vpop.permute.xlu0 %37
    %41 = vset.pattern.permute.xlu0 0
    %42 = vperm.xlu0 %41, %v32
    %v43 = vpop.permute.xlu0 %42
    %46 = vset.pattern.permute.xlu0 0
    %47 = vperm.xlu0 %46, %v33
    %v48 = vpop.permute.xlu0 %47
    %51 = vset.pattern.permute.xlu0 0
    %52 = vperm.xlu0 %51, %v34
    %v53 = vpop.permute.xlu0 %52
    %vm55 = vcmask 39936
    %v57 = vsel %vm55, %v27, 0
    %v60 = vsel %vm55, %v28, 0
    %v63 = vsel %vm55, %v29, 0
    %v66 = vsel %vm55, %v30, 0
    %vm68 = vcmask 1044480
    %v70 = vsel %vm68, %v26, 0
    %72 = vmatpush.msra.mxu0 0.0
    %73 = vmatpush.msra.mxu0 0.0
    %74 = vmatpush.msra.mxu0 0.0
    %75 = vmatpush.msra.mxu0 0.0
    %76 = vmatpush.msra.mxu0 0.0
    %77 = vmatpush.msra.mxu0 0.0
    %78 = vmatpush.msra.mxu0 0.0
    %79 = vmatpush.msra.mxu0 0.0
    %80 = vmatpush.msra.mxu0 0.0
    %81 = vmatpush.msra.mxu0 0.0
    %82 = vmatpush.msra.mxu0 0.0
    %83 = vmatpush.msra.mxu0 0.0
    %84 = vmatpush.msra.mxu0 0.0
    %85 = vmatpush.msra.mxu0 0.0
    %86 = vmatpush.msra.mxu0 0.0
    %87 = vmatpush.msra.mxu0 %v70
    %88 = vmatmul.f32.gmra.mxu0 %v57
    %v89 = vpop.f32.mrf.mxu0
    %v90 = vadd.f32 %v38, %v89
    %91 = vmatmul.f32.gmra.mxu0 %v60
    %v92 = vpop.f32.mrf.mxu0
    %v93 = vadd.f32 %v43, %v92
    %94 = vmatmul.f32.gmra.mxu0 %v63
    %v95 = vpop.f32.mrf.mxu0
    %v96 = vadd.f32 %v48, %v95
    %97 = vmatmul.f32.gmra.mxu0 %v66
    %v98 = vpop.f32.mrf.mxu0
    %v99 = vadd.f32 %v53, %v98
    %100 = vdwg.mxu0
    %v101 = vtanh.pop %v90
    %v102 = vtanh.pop %v93
    %v103 = vtanh.pop %v96
    %v104 = vtanh.pop %v99
    %v105 = vld [vmem:[%s3] sm:$0xf]
    %v106 = vld [vmem:[%s4] sm:$0xf]
    %108 = vset.pattern.permute.xlu0 0
    %109 = vperm.xlu0 %108, %v106
    %v110 = vpop.permute.xlu0 %109
    %vm112 = vcmask 261120
    %v114 = vsel %vm112, %v105, 0
    %116 = vmatpush.msra.mxu0 0.0
    %117 = vmatpush.msra.mxu0 0.0
    %118 = vmatpush.msra.mxu0 0.0
    %119 = vmatpush.msra.mxu0 0.0
    %120 = vmatpush.msra.mxu0 0.0
    %121 = vmatpush.msra.mxu0 0.0
    %122 = vmatpush.msra.mxu0 0.0
    %123 = vmatpush.msra.mxu0 0.0
    %124 = vmatpush.msra.mxu0 0.0
    %125 = vmatpush.msra.mxu0 0.0
    %126 = vmatpush.msra.mxu0 0.0
    %127 = vmatpush.msra.mxu0 0.0
    %128 = vmatpush.msra.mxu0 %v104
    %129 = vmatpush.msra.mxu0 %v103
    %130 = vmatpush.msra.mxu0 %v102
    %131 = vmatpush.msra.mxu0 %v101
    %132 = vmatmul.f32.gmra.mxu0 %v114
    %v133 = vpop.f32.mrf.mxu0
    %v134 = vadd.f32 %v110, %v133
    %135 = vdwg.mxu0
    %136 = vst [vmem:[#allocation2] sm:$0xf] %v134
    // Predicated region
    $region22: #{tpu_custom_call.1} parent=1 // pred_check
      _
    $region23: #{tpu_custom_call.1} parent=1 // pred_check_branch
      %138 = sbr.rel (0) target = $region25
    $region24: #{tpu_custom_call.1} parent=1 // pred_region
      %140 = vsyncadd [#allocation3], 0
      %s142 = sshll.u32 [#allocation2], 4
      %s143 = int_to_ptr.vmem [resolvable:$true] %s142
      %s144 = sshll.u32 %s5, 4
      %s145 = int_to_ptr.hbm [resolvable:$true] %s144
      %147 = dma.vmem_to_hbm [thread:$0]  %s143, 64, %s145, [#allocation3]
    $region25: #{tpu_custom_call.1} parent=1 // pred_fallthru
      _
    // Predicated region
    $region26: #{tpu_custom_call.1} parent=1 // pred_check
      _
    $region27: #{tpu_custom_call.1} parent=1 // pred_check_branch
      %149 = sbr.rel (0) target = $region29
    $region28: #{tpu_custom_call.1} parent=1 // pred_region
      %151 = dma.done [#allocation3], 64
    $region29: #{tpu_custom_call.1} parent=1 // pred_fallthru
      _
    %152 = vsyncpa [#allocation3], 1

</llo_original>
